<compile_context>
chip_gen: v7x
topology: tpu7x:2x2x1
jax: 0.10.0
libtpu: 0.0.40
codegen_flags: <defaults>
</compile_context>

<pallas_src>
import jax
import jax.numpy as jnp
import numpy as np
from jax.experimental import pallas as pl
from jax.experimental.pallas import tpu as pltpu

# Per-RGB-channel constants from PreProcess.__init__ (applied after the
# [2, 1, 0] flip of the incoming BGR-ordered channels).
MEAN = (0.408, 0.447, 0.47)
STD = (0.289, 0.274, 0.278)
# Fused affine:  out = x * SCALE[c] + BIAS[c]  ==  (x/255 - MEAN[c]) / STD[c]
SCALE = tuple(1.0 / (255.0 * s) for s in STD)
BIAS = tuple(-m / s for m, s in zip(MEAN, STD))


def preprocess_kernel(scale_ref, bias_ref, x_ref, o_ref):
    # x_ref / o_ref:      (1, th, W*3) lane-dense NHWC-interleaved tiles.
    # scale_ref/bias_ref: (1, 1, W*3) period-3 fused constants (resident: the
    #                     constant index map means they are DMA'd once).
    o_ref[...] = x_ref[...] * scale_ref[...] + bias_ref[...]


def _pick_tile_h(n, h, row_bytes):
    """Pick th for (1, th, W*3) blocks.

    - in + out, double-buffered (4 live buffers) stays under ~12 MiB so the
      kernel fits every generation's default scoped-VMEM limit without
      vmem_limit_bytes overrides (16 MiB v5e, 32 MiB v6e/v7x).
    - Target ~1-2 MiB per block (near HBM roofline); bigger buys nothing for a
      purely HBM-bandwidth-bound kernel, smaller adds ~0.35us/step overhead.
    - With batch==1 cap th so the parallel H axis has >=2 (ideally 4) steps:
      v7x has 2 TensorCores per chip and would otherwise leave one idle.
    """
    if h <= 8:
        return h
    vmem_budget = 12 << 20
    max_th_vmem = max(8, (vmem_budget // (4 * row_bytes)) // 8 * 8)
    target_th = max(8, ((2 << 20) // row_bytes) // 8 * 8)
    th = min(max_th_vmem, target_th)
    if n == 1:
        quarter = max(8, ((pl.cdiv(h, 4) + 7) // 8) * 8)
        th = min(th, max(quarter, 64))
    th = min(th, (h // 8) * 8)   # multiple of 8, not exceeding H
    return max(th, 8)


def full_net_forward(x, *, tile_h=None):
    """FullNet forward (PreProcess stage): (N, H, W, 3) f32 NHWC -> (N, 3, H, W) f32 NCHW."""
    n, h, w, c = x.shape
    assert c == 3, "expected NHWC input with 3 channels"
    wc = w * 3
    x_flat = x.reshape(n, h, wc)   # free reshape: NHWC is (w, c)-interleaved

    # Period-3 lane pattern: memory position 3*w + k holds input channel k,
    # which the module routes to output channel 2-k, so that lane gets output
    # channel (2-k)'s fused scale/bias.
    sc = jnp.asarray([SCALE[2], SCALE[1], SCALE[0]], jnp.float32)
    bs = jnp.asarray([BIAS[2], BIAS[1], BIAS[0]], jnp.float32)
    scale_pat = jnp.tile(sc, w).reshape(1, 1, wc)
    bias_pat = jnp.tile(bs, w).reshape(1, 1, wc)

    row_bytes = wc * x.dtype.itemsize
    th = tile_h if tile_h is not None else _pick_tile_h(n, h, row_bytes)
    th = min(th, h)
    assert th == h or th % 8 == 0, "tile_h must be a multiple of 8 (or the full H)"

    # Partial last H-block is safe: the kernel is elementwise and padded-region
    # writes are discarded by the pipeline.
    grid = (n, pl.cdiv(h, th))

    y = pl.pallas_call(
        preprocess_kernel,
        out_shape=jax.ShapeDtypeStruct((n, h, wc), jnp.float32),
        grid=grid,
        in_specs=[
            pl.BlockSpec((1, 1, wc), lambda i, j: (0, 0, 0)),    # scale (resident)
            pl.BlockSpec((1, 1, wc), lambda i, j: (0, 0, 0)),    # bias  (resident)
            pl.BlockSpec((1, th, wc), lambda i, j: (i, j, 0)),   # input tile
        ],
        out_specs=pl.BlockSpec((1, th, wc), lambda i, j: (i, j, 0)),
        compiler_params=pltpu.CompilerParams(
            dimension_semantics=("parallel", "parallel")),
    )(scale_pat, bias_pat, x_flat)

    # Single remaining layout op (XLA fuses the channel reverse into the
    # transpose): interleaved NHWC result -> NCHW planes in [2, 1, 0] order.
    out = jnp.transpose(y.reshape(n, h, w, 3)[..., ::-1], (0, 3, 1, 2))
    # TODO(synk): pose_net forward (mobilenetv2 backbone + CenterNet heads)
    # would run here; if implemented in JAX, keep NHWC and drop the transpose.
    return out


def _reference(x):
    # Pure-JAX reference of PreProcess.forward (NHWC in -> NCHW out).
    xt = jnp.transpose(x, (0, 3, 1, 2))          # NHWC -> NCHW
    xt = xt[:, ::-1]                             # [2, 1, 0] channel flip
    xt = xt / 255.0
    mean = jnp.asarray(MEAN, jnp.float32).reshape(1, 3, 1, 1)
    std = jnp.asarray(STD, jnp.float32).reshape(1, 3, 1, 1)
    return (xt - mean) / std


if __name__ == "__main__":
    key = jax.random.PRNGKey(0)
    k0, k1 = jax.random.split(key)
    fwd = jax.jit(full_net_forward, static_argnames=("tile_h",))

    # Small NHWC input consistent with the (1, 512, 512, 3) torch input; W=128
    # keeps the W*3 lane dim a multiple of 128.
    x = jax.random.uniform(k0, (2, 64, 128, 3), dtype=jnp.float32) * 255.0
    ref = _reference(x)

    # Default (heuristic) tiling path.
    out = jax.block_until_ready(fwd(x))
    np.testing.assert_allclose(np.asarray(out), np.asarray(ref),
                               rtol=1e-5, atol=1e-5)
    assert out.shape == (2, 3, 64, 128) and out.dtype == jnp.float32

    # Multi-step H grid (grid = (2, 4)).
    out2 = jax.block_until_ready(fwd(x, tile_h=16))
    np.testing.assert_allclose(np.asarray(out2), np.asarray(ref),
                               rtol=1e-5, atol=1e-5)

    # Non-divisible H -> cdiv grid with a partial last block (40 = 16 + 16 + 8).
    x3 = jax.random.uniform(k1, (1, 40, 128, 3), dtype=jnp.float32) * 255.0
    out3 = jax.block_until_ready(fwd(x3, tile_h=16))
    np.testing.assert_allclose(np.asarray(out3), np.asarray(_reference(x3)),
                               rtol=1e-5, atol=1e-5)

    print("KERNEL_OK")
</pallas_src>

<mosaic_0001>
module attributes {stable_mosaic.version = 11 : i64} {
  func.func @preprocess_kernel(%arg0: i32, %arg1: i32, %arg2: memref<1x1x384xf32, #tpu.memory_space<vmem>>, %arg3: memref<1x1x384xf32, #tpu.memory_space<vmem>>, %arg4: memref<1x64x384xf32, #tpu.memory_space<vmem>>, %arg5: memref<1x64x384xf32, #tpu.memory_space<vmem>>) attributes {dimension_semantics = [#tpu.dimension_semantics<parallel>, #tpu.dimension_semantics<parallel>], iteration_bounds = array<i64: 2, 1>, scalar_prefetch = 0 : i64, scratch_operands = 0 : i64, tpu.core_type = #tpu.core_type<tc>, window_params = [{pipeline_mode = #tpu.pipeline_mode<synchronous>, transform_indices = @transform_0, window_bounds = array<i64: 1, 1, 384>}, {pipeline_mode = #tpu.pipeline_mode<synchronous>, transform_indices = @transform_1, window_bounds = array<i64: 1, 1, 384>}, {transform_indices = @transform_2, window_bounds = array<i64: 1, 64, 384>}, {transform_indices = @transform_3, window_bounds = array<i64: 1, 64, 384>}]} {
    %c0 = arith.constant 0 : index
    %c0_0 = arith.constant 0 : index
    %c0_1 = arith.constant 0 : index
    %0 = vector.load %arg4[%c0, %c0_0, %c0_1] : memref<1x64x384xf32, #tpu.memory_space<vmem>>, vector<1x64x384xf32>
    %c0_2 = arith.constant 0 : index
    %c0_3 = arith.constant 0 : index
    %c0_4 = arith.constant 0 : index
    %1 = vector.load %arg2[%c0_2, %c0_3, %c0_4] : memref<1x1x384xf32, #tpu.memory_space<vmem>>, vector<1x1x384xf32>
    %2 = vector.broadcast %1 : vector<1x1x384xf32> to vector<1x64x384xf32>
    %3 = arith.mulf %0, %2 : vector<1x64x384xf32>
    %c0_5 = arith.constant 0 : index
    %c0_6 = arith.constant 0 : index
    %c0_7 = arith.constant 0 : index
    %4 = vector.load %arg3[%c0_5, %c0_6, %c0_7] : memref<1x1x384xf32, #tpu.memory_space<vmem>>, vector<1x1x384xf32>
    %5 = vector.broadcast %4 : vector<1x1x384xf32> to vector<1x64x384xf32>
    %6 = arith.addf %3, %5 : vector<1x64x384xf32>
    %c0_8 = arith.constant 0 : index
    %c0_9 = arith.constant 0 : index
    %c0_10 = arith.constant 0 : index
    %7 = vector.load %arg5[%c0_8, %c0_9, %c0_10] : memref<1x64x384xf32, #tpu.memory_space<vmem>>, vector<1x64x384xf32>
    tpu.vector_store %arg5[%c0_8, %c0_9, %c0_10], %6 {strides = array<i32>} : memref<1x64x384xf32, #tpu.memory_space<vmem>>, vector<1x64x384xf32>,
    return
  }
  func.func @transform_0(%arg0: i32, %arg1: i32) -> (i32, i32, i32) {
    %c0_i32 = arith.constant 0 : i32
    %c0_i32_0 = arith.constant 0 : i32
    %c0_i32_1 = arith.constant 0 : i32
    %c0_i32_2 = arith.constant 0 : i32
    return %c0_i32, %c0_i32_0, %c0_i32_1 : i32, i32, i32
  }
  func.func @transform_1(%arg0: i32, %arg1: i32) -> (i32, i32, i32) {
    %c0_i32 = arith.constant 0 : i32
    %c0_i32_0 = arith.constant 0 : i32
    %c0_i32_1 = arith.constant 0 : i32
    %c0_i32_2 = arith.constant 0 : i32
    return %c0_i32, %c0_i32_0, %c0_i32_1 : i32, i32, i32
  }
  func.func @transform_2(%arg0: i32, %arg1: i32) -> (i32, i32, i32) {
    %c0_i32 = arith.constant 0 : i32
    %c0_i32_0 = arith.constant 0 : i32
    return %arg0, %arg1, %c0_i32 : i32, i32, i32
  }
  func.func @transform_3(%arg0: i32, %arg1: i32) -> (i32, i32, i32) {
    %c0_i32 = arith.constant 0 : i32
    %c0_i32_0 = arith.constant 0 : i32
    return %arg0, %arg1, %c0_i32 : i32, i32, i32
  }
}

</mosaic_0001>

<llo_original>
// kernel: tile.10
$region0: #{tile.10}
  #allocation0 [shape = 's32[1]{0}', space=sflag, size = 0x4, scoped, tag = 'scoped memory for tile.10']
  %s0 = inlined_call_operand.vmem [shape: f32[3], index: 0, kind: input, shape index: {}]
  %s1 = inlined_call_operand.vmem [shape: f32[128,3], index: 1, kind: output, shape index: {}]
  // Predicated region
  $region2: #{tile.10} parent=0 // pred_check
    _
  $region3: #{tile.10} parent=0 // pred_check_branch
    %3 = sbr.rel (0) target = $region5
  $region4: #{tile.10} parent=0 // pred_region
    _
  $region5: #{tile.10} parent=0 // pred_fallthru
    _
  %v4 = vld [vmem:[%s0] ss:$0 sm:$0xff]
  %5 = vst [vmem:[%s1] sm:$0xff] %v4
  %s6 = scalar_lea.vmem %s1, 8
  %7 = vst [vmem:[%s6] sm:$0xff] %v4
  %s8 = scalar_lea.vmem %s1, 16
  %9 = vst [vmem:[%s8] sm:$0xff] %v4
  %s10 = scalar_lea.vmem %s1, 24
  %11 = vst [vmem:[%s10] sm:$0xff] %v4
  %s12 = scalar_lea.vmem %s1, 32
  %13 = vst [vmem:[%s12] sm:$0xff] %v4
  %s14 = scalar_lea.vmem %s1, 40
  %15 = vst [vmem:[%s14] sm:$0xff] %v4
  %s16 = scalar_lea.vmem %s1, 48
  %17 = vst [vmem:[%s16] sm:$0xff] %v4
  %s18 = scalar_lea.vmem %s1, 56
  %19 = vst [vmem:[%s18] sm:$0xff] %v4
  %s20 = scalar_lea.vmem %s1, 64
  %21 = vst [vmem:[%s20] sm:$0xff] %v4
  %s22 = scalar_lea.vmem %s1, 72
  %23 = vst [vmem:[%s22] sm:$0xff] %v4
  %s24 = scalar_lea.vmem %s1, 80
  %25 = vst [vmem:[%s24] sm:$0xff] %v4
  %s26 = scalar_lea.vmem %s1, 88
  %27 = vst [vmem:[%s26] sm:$0xff] %v4
  %s28 = scalar_lea.vmem %s1, 96
  %29 = vst [vmem:[%s28] sm:$0xff] %v4
  %s30 = scalar_lea.vmem %s1, 104
  %31 = vst [vmem:[%s30] sm:$0xff] %v4
  %s32 = scalar_lea.vmem %s1, 112
  %33 = vst [vmem:[%s32] sm:$0xff] %v4
  %s34 = scalar_lea.vmem %s1, 120
  %35 = vst [vmem:[%s34] sm:$0xff] %v4

// kernel: tile.11
$region0: #{tile.11}
  %s0 = inlined_call_operand.vmem [shape: f32[128,3], index: 0, kind: input, shape index: {}]
  %s1 = inlined_call_operand.vmem [shape: f32[1,1,384], index: 1, kind: output, shape index: {}]
  $region1: #{tile.11} parent=0
    #allocation0 [shape = 'u8[12288]{0}', space=vmem, size = 0x3000, scoped, tag = 'scoped mem for output reshape']
    %v2 = vld [vmem:[%s0] sm:$0x1]
    %vm3 = vcmask 23552
    %4 = vst.msk [vmem:[#allocation0] sm:$0x1] %vm3, %v2
    %s5 = scalar_lea.vmem %s0, 85
    %v6 = vld [vmem:[%s5] sm:$0x1]
    %s7 = scalar_lea.vmem %s0, 85
    %v8 = vld [vmem:[%s7] sm:$0x1]
    %vm9 = vcmask 7168
    %v10 = vsel %vm9, %v8, %v6
    %11 = vrot.lane.b32.xlu0 %v10, 127
    %v12 = vpop.permute.xlu0 %11
    %vm13 = vcmask 15360
    %s14 = scalar_lea.vmem [#allocation0], 16
    %15 = vst.msk [vmem:[%s14] sm:$0x1] %vm13, %v12
    %vm16 = vcmask 1048568
    %s17 = scalar_lea.vmem [#allocation0], 8
    %18 = vst.msk [vmem:[%s17] sm:$0x1] %vm16, %v12
    %s19 = scalar_lea.vmem %s0, 42
    %v20 = vld [vmem:[%s19] sm:$0x1]
    %s21 = scalar_lea.vmem %s0, 42
    %v22 = vld [vmem:[%s21] sm:$0x1]
    %vm23 = vcmask 15360
    %v24 = vsel %vm23, %v22, %v20
    %25 = vrot.lane.b32.xlu0 %v24, 126
    %v26 = vpop.permute.xlu0 %25
    %vm27 = vcmask 7168
    %s28 = scalar_lea.vmem [#allocation0], 8
    %29 = vst.msk [vmem:[%s28] sm:$0x1] %vm27, %v26
    %vm30 = vcmask 1048560
    %31 = vst.msk [vmem:[#allocation0] sm:$0x1] %vm30, %v26
    %s32 = scalar_lea.vmem %s0, 127
    %v33 = vld [vmem:[%s32] sm:$0x1]
    %34 = vrot.lane.b32.xlu0 %v33, 125
    %v35 = vpop.permute.xlu0 %34
    %vm36 = vcmask 1048552
    %s37 = scalar_lea.vmem [#allocation0], 16
    %38 = vst.msk [vmem:[%s37] sm:$0x1] %vm36, %v35
    %s39 = scalar_lea.vmem %s0, 84
    %v40 = vld [vmem:[%s39] sm:$0x1]
    %41 = vrot.lane.b32.xlu0 %v40, 124
    %v42 = vpop.permute.xlu0 %41
    %vm43 = vcmask 1040352
    %s44 = scalar_lea.vmem [#allocation0], 8
    %45 = vst.msk [vmem:[%s44] sm:$0x1] %vm43, %v42
    %s46 = scalar_lea.vmem %s0, 41
    %v47 = vld [vmem:[%s46] sm:$0x1]
    %48 = vrot.lane.b32.xlu0 %v47, 123
    %v49 = vpop.permute.xlu0 %48
    %vm50 = vcmask 1032152
    %51 = vst.msk [vmem:[#allocation0] sm:$0x1] %vm50, %v49
    %s52 = scalar_lea.vmem %s0, 126
    %v53 = vld [vmem:[%s52] sm:$0x1]
    %54 = vrot.lane.b32.xlu0 %v53, 122
    %v55 = vpop.permute.xlu0 %54
    %vm56 = vcmask 1023952
    %s57 = scalar_lea.vmem [#allocation0], 16
    %58 = vst.msk [vmem:[%s57] sm:$0x1] %vm56, %v55
    %s59 = scalar_lea.vmem %s0, 83
    %v60 = vld [vmem:[%s59] sm:$0x1]
    %61 = vrot.lane.b32.xlu0 %v60, 121
    %v62 = vpop.permute.xlu0 %61
    %vm63 = vcmask 1015752
    %s64 = scalar_lea.vmem [#allocation0], 8
    %65 = vst.msk [vmem:[%s64] sm:$0x1] %vm63, %v62
    %s66 = scalar_lea.vmem %s0, 40
    %v67 = vld [vmem:[%s66] sm:$0x1]
    %68 = vrot.lane.b32.xlu0 %v67, 120
    %v69 = vpop.permute.xlu0 %68
    %vm70 = vcmask 1007552
    %71 = vst.msk [vmem:[#allocation0] sm:$0x1] %vm70, %v69
    %s72 = scalar_lea.vmem %s0, 125
    %v73 = vld [vmem:[%s72] sm:$0x1]
    %74 = vrot.lane.b32.xlu0 %v73, 119
    %v75 = vpop.permute.xlu0 %74
    %vm76 = vcmask 999352
    %s77 = scalar_lea.vmem [#allocation0], 16
    %78 = vst.msk [vmem:[%s77] sm:$0x1] %vm76, %v75
    %s79 = scalar_lea.vmem %s0, 82
    %v80 = vld [vmem:[%s79] sm:$0x1]
    %81 = vrot.lane.b32.xlu0 %v80, 118
    %v82 = vpop.permute.xlu0 %81
    %vm83 = vcmask 991152
    %s84 = scalar_lea.vmem [#allocation0], 8
    %85 = vst.msk [vmem:[%s84] sm:$0x1] %vm83, %v82
    %s86 = scalar_lea.vmem %s0, 39
    %v87 = vld [vmem:[%s86] sm:$0x1]
    %88 = vrot.lane.b32.xlu0 %v87, 117
    %v89 = vpop.permute.xlu0 %88
    %vm90 = vcmask 982952
    %91 = vst.msk [vmem:[#allocation0] sm:$0x1] %vm90, %v89
    %s92 = scalar_lea.vmem %s0, 124
    %v93 = vld [vmem:[%s92] sm:$0x1]
    %94 = vrot.lane.b32.xlu0 %v93, 116
    %v95 = vpop.permute.xlu0 %94
    %vm96 = vcmask 974752
    %s97 = scalar_lea.vmem [#allocation0], 16
    %98 = vst.msk [vmem:[%s97] sm:$0x1] %vm96, %v95
    %s99 = scalar_lea.vmem %s0, 81
    %v100 = vld [vmem:[%s99] sm:$0x1]
    %101 = vrot.lane.b32.xlu0 %v100, 115
    %v102 = vpop.permute.xlu0 %101
    %vm103 = vcmask 966552
    %s104 = scalar_lea.vmem [#allocation0], 8
    %105 = vst.msk [vmem:[%s104] sm:$0x1] %vm103, %v102
    %s106 = scalar_lea.vmem %s0, 38
    %v107 = vld [vmem:[%s106] sm:$0x1]
    %108 = vrot.lane.b32.xlu0 %v107, 114
    %v109 = vpop.permute.xlu0 %108
    %vm110 = vcmask 958352
    %111 = vst.msk [vmem:[#allocation0] sm:$0x1] %vm110, %v109
    %s112 = scalar_lea.vmem %s0, 123
    %v113 = vld [vmem:[%s112] sm:$0x1]
    %114 = vrot.lane.b32.xlu0 %v113, 113
    %v115 = vpop.permute.xlu0 %114
    %vm116 = vcmask 950152
    %s117 = scalar_lea.vmem [#allocation0], 16
    %118 = vst.msk [vmem:[%s117] sm:$0x1] %vm116, %v115
    %s119 = scalar_lea.vmem %s0, 80
    %v120 = vld [vmem:[%s119] sm:$0x1]
    %121 = vrot.lane.b32.xlu0 %v120, 112
    %v122 = vpop.permute.xlu0 %121
    %vm123 = vcmask 941952
    %s124 = scalar_lea.vmem [#allocation0], 8
    %125 = vst.msk [vmem:[%s124] sm:$0x1] %vm123, %v122
    %s126 = scalar_lea.vmem %s0, 37
    %v127 = vld [vmem:[%s126] sm:$0x1]
    %128 = vrot.lane.b32.xlu0 %v127, 111
    %v129 = vpop.permute.xlu0 %128
    %vm130 = vcmask 933752
    %131 = vst.msk [vmem:[#allocation0] sm:$0x1] %vm130, %v129
    %s132 = scalar_lea.vmem %s0, 122
    %v133 = vld [vmem:[%s132] sm:$0x1]
    %134 = vrot.lane.b32.xlu0 %v133, 110
    %v135 = vpop.permute.xlu0 %134
    %vm136 = vcmask 925552
    %s137 = scalar_lea.vmem [#allocation0], 16
    %138 = vst.msk [vmem:[%s137] sm:$0x1] %vm136, %v135
    %s139 = scalar_lea.vmem %s0, 79
    %v140 = vld [vmem:[%s139] sm:$0x1]
    %141 = vrot.lane.b32.xlu0 %v140, 109
    %v142 = vpop.permute.xlu0 %141
    %vm143 = vcmask 917352
    %s144 = scalar_lea.vmem [#allocation0], 8
    %145 = vst.msk [vmem:[%s144] sm:$0x1] %vm143, %v142
    %s146 = scalar_lea.vmem %s0, 36
    %v147 = vld [vmem:[%s146] sm:$0x1]
    %148 = vrot.lane.b32.xlu0 %v147, 108
    %v149 = vpop.permute.xlu0 %148
    %vm150 = vcmask 909152
    %151 = vst.msk [vmem:[#allocation0] sm:$0x1] %vm150, %v149
    %s152 = scalar_lea.vmem %s0, 121
    %v153 = vld [vmem:[%s152] sm:$0x1]
    %154 = vrot.lane.b32.xlu0 %v153, 107
    %v155 = vpop.permute.xlu0 %154
    %vm156 = vcmask 900952
    %s157 = scalar_lea.vmem [#allocation0], 16
    %158 = vst.msk [vmem:[%s157] sm:$0x1] %vm156, %v155
    %s159 = scalar_lea.vmem %s0, 78
    %v160 = vld [vmem:[%s159] sm:$0x1]
    %161 = vrot.lane.b32.xlu0 %v160, 106
    %v162 = vpop.permute.xlu0 %161
    %vm163 = vcmask 892752
    %s164 = scalar_lea.vmem [#allocation0], 8
    %165 = vst.msk [vmem:[%s164] sm:$0x1] %vm163, %v162
    %s166 = scalar_lea.vmem %s0, 35
    %v167 = vld [vmem:[%s166] sm:$0x1]
    %168 = vrot.lane.b32.xlu0 %v167, 105
    %v169 = vpop.permute.xlu0 %168
    %vm170 = vcmask 884552
    %171 = vst.msk [vmem:[#allocation0] sm:$0x1] %vm170, %v169
    %s172 = scalar_lea.vmem %s0, 120
    %v173 = vld [vmem:[%s172] sm:$0x1]
    %174 = vrot.lane.b32.xlu0 %v173, 104
    %v175 = vpop.permute.xlu0 %174
    %vm176 = vcmask 876352
    %s177 = scalar_lea.vmem [#allocation0], 16
    %178 = vst.msk [vmem:[%s177] sm:$0x1] %vm176, %v175
    %s179 = scalar_lea.vmem %s0, 77
    %v180 = vld [vmem:[%s179] sm:$0x1]
    %181 = vrot.lane.b32.xlu0 %v180, 103
    %v182 = vpop.permute.xlu0 %181
    %vm183 = vcmask 868152
    %s184 = scalar_lea.vmem [#allocation0], 8
    %185 = vst.msk [vmem:[%s184] sm:$0x1] %vm183, %v182
    %s186 = scalar_lea.vmem %s0, 34
    %v187 = vld [vmem:[%s186] sm:$0x1]
    %188 = vrot.lane.b32.xlu0 %v187, 102
    %v189 = vpop.permute.xlu0 %188
    %vm190 = vcmask 859952
    %191 = vst.msk [vmem:[#allocation0] sm:$0x1] %vm190, %v189
    %s192 = scalar_lea.vmem %s0, 119
    %v193 = vld [vmem:[%s192] sm:$0x1]
    %194 = vrot.lane.b32.xlu0 %v193, 101
    %v195 = vpop.permute.xlu0 %194
    %vm196 = vcmask 851752
    %s197 = scalar_lea.vmem [#allocation0], 16
    %198 = vst.msk [vmem:[%s197] sm:$0x1] %vm196, %v195
    %s199 = scalar_lea.vmem %s0, 76
    %v200 = vld [vmem:[%s199] sm:$0x1]
    %201 = vrot.lane.b32.xlu0 %v200, 100
    %v202 = vpop.permute.xlu0 %201
    %vm203 = vcmask 843552
    %s204 = scalar_lea.vmem [#allocation0], 8
    %205 = vst.msk [vmem:[%s204] sm:$0x1] %vm203, %v202
    %s206 = scalar_lea.vmem %s0, 33
    %v207 = vld [vmem:[%s206] sm:$0x1]
    %208 = vrot.lane.b32.xlu0 %v207, 99
    %v209 = vpop.permute.xlu0 %208
    %vm210 = vcmask 835352
    %211 = vst.msk [vmem:[#allocation0] sm:$0x1] %vm210, %v209
    %s212 = scalar_lea.vmem %s0, 118
    %v213 = vld [vmem:[%s212] sm:$0x1]
    %214 = vrot.lane.b32.xlu0 %v213, 98
    %v215 = vpop.permute.xlu0 %214
    %vm216 = vcmask 827152
    %s217 = scalar_lea.vmem [#allocation0], 16
    %218 = vst.msk [vmem:[%s217] sm:$0x1] %vm216, %v215
    %s219 = scalar_lea.vmem %s0, 75
    %v220 = vld [vmem:[%s219] sm:$0x1]
    %221 = vrot.lane.b32.xlu0 %v220, 97
    %v222 = vpop.permute.xlu0 %221
    %vm223 = vcmask 818952
    %s224 = scalar_lea.vmem [#allocation0], 8
    %225 = vst.msk [vmem:[%s224] sm:$0x1] %vm223, %v222
    %s226 = scalar_lea.vmem %s0, 32
    %v227 = vld [vmem:[%s226] sm:$0x1]
    %228 = vrot.lane.b32.xlu0 %v227, 96
    %v229 = vpop.permute.xlu0 %228
    %vm230 = vcmask 810752
    %231 = vst.msk [vmem:[#allocation0] sm:$0x1] %vm230, %v229
    %s232 = scalar_lea.vmem %s0, 117
    %v233 = vld [vmem:[%s232] sm:$0x1]
    %234 = vrot.lane.b32.xlu0 %v233, 95
    %v235 = vpop.permute.xlu0 %234
    %vm236 = vcmask 802552
    %s237 = scalar_lea.vmem [#allocation0], 16
    %238 = vst.msk [vmem:[%s237] sm:$0x1] %vm236, %v235
    %s239 = scalar_lea.vmem %s0, 74
    %v240 = vld [vmem:[%s239] sm:$0x1]
    %241 = vrot.lane.b32.xlu0 %v240, 94
    %v242 = vpop.permute.xlu0 %241
    %vm243 = vcmask 794352
    %s244 = scalar_lea.vmem [#allocation0], 8
    %245 = vst.msk [vmem:[%s244] sm:$0x1] %vm243, %v242
    %s246 = scalar_lea.vmem %s0, 31
    %v247 = vld [vmem:[%s246] sm:$0x1]
    %248 = vrot.lane.b32.xlu0 %v247, 93
    %v249 = vpop.permute.xlu0 %248
    %vm250 = vcmask 786152
    %251 = vst.msk [vmem:[#allocation0] sm:$0x1] %vm250, %v249
    %s252 = scalar_lea.vmem %s0, 116
    %v253 = vld [vmem:[%s252] sm:$0x1]
    %254 = vrot.lane.b32.xlu0 %v253, 92
    %v255 = vpop.permute.xlu0 %254
    %vm256 = vcmask 777952
    %s257 = scalar_lea.vmem [#allocation0], 16
    %258 = vst.msk [vmem:[%s257] sm:$0x1] %vm256, %v255
    %s259 = scalar_lea.vmem %s0, 73
    %v260 = vld [vmem:[%s259] sm:$0x1]
    %261 = vrot.lane.b32.xlu0 %v260, 91
    %v262 = vpop.permute.xlu0 %261
    %vm263 = vcmask 769752
    %s264 = scalar_lea.vmem [#allocation0], 8
    %265 = vst.msk [vmem:[%s264] sm:$0x1] %vm263, %v262
    %s266 = scalar_lea.vmem %s0, 30
    %v267 = vld [vmem:[%s266] sm:$0x1]
    %268 = vrot.lane.b32.xlu0 %v267, 90
    %v269 = vpop.permute.xlu0 %268
    %vm270 = vcmask 761552
    %271 = vst.msk [vmem:[#allocation0] sm:$0x1] %vm270, %v269
    %s272 = scalar_lea.vmem %s0, 115
    %v273 = vld [vmem:[%s272] sm:$0x1]
    %274 = vrot.lane.b32.xlu0 %v273, 89
    %v275 = vpop.permute.xlu0 %274
    %vm276 = vcmask 753352
    %s277 = scalar_lea.vmem [#allocation0], 16
    %278 = vst.msk [vmem:[%s277] sm:$0x1] %vm276, %v275
    %s279 = scalar_lea.vmem %s0, 72
    %v280 = vld [vmem:[%s279] sm:$0x1]
    %281 = vrot.lane.b32.xlu0 %v280, 88
    %v282 = vpop.permute.xlu0 %281
    %vm283 = vcmask 745152
    %s284 = scalar_lea.vmem [#allocation0], 8
    %285 = vst.msk [vmem:[%s284] sm:$0x1] %vm283, %v282
    %s286 = scalar_lea.vmem %s0, 29
    %v287 = vld [vmem:[%s286] sm:$0x1]
    %288 = vrot.lane.b32.xlu0 %v287, 87
    %v289 = vpop.permute.xlu0 %288
    %vm290 = vcmask 736952
    %291 = vst.msk [vmem:[#allocation0] sm:$0x1] %vm290, %v289
    %s292 = scalar_lea.vmem %s0, 114
    %v293 = vld [vmem:[%s292] sm:$0x1]
    %294 = vrot.lane.b32.xlu0 %v293, 86
    %v295 = vpop.permute.xlu0 %294
    %vm296 = vcmask 728752
    %s297 = scalar_lea.vmem [#allocation0], 16
    %298 = vst.msk [vmem:[%s297] sm:$0x1] %vm296, %v295
    %s299 = scalar_lea.vmem %s0, 71
    %v300 = vld [vmem:[%s299] sm:$0x1]
    %301 = vrot.lane.b32.xlu0 %v300, 85
    %v302 = vpop.permute.xlu0 %301
    %vm303 = vcmask 720552
    %s304 = scalar_lea.vmem [#allocation0], 8
    %305 = vst.msk [vmem:[%s304] sm:$0x1] %vm303, %v302
    %s306 = scalar_lea.vmem %s0, 28
    %v307 = vld [vmem:[%s306] sm:$0x1]
    %308 = vrot.lane.b32.xlu0 %v307, 84
    %v309 = vpop.permute.xlu0 %308
    %vm310 = vcmask 712352
    %311 = vst.msk [vmem:[#allocation0] sm:$0x1] %vm310, %v309
    %s312 = scalar_lea.vmem %s0, 113
    %v313 = vld [vmem:[%s312] sm:$0x1]
    %314 = vrot.lane.b32.xlu0 %v313, 83
    %v315 = vpop.permute.xlu0 %314
    %vm316 = vcmask 704152
    %s317 = scalar_lea.vmem [#allocation0], 16
    %318 = vst.msk [vmem:[%s317] sm:$0x1] %vm316, %v315
    %s319 = scalar_lea.vmem %s0, 70
    %v320 = vld [vmem:[%s319] sm:$0x1]
    %321 = vrot.lane.b32.xlu0 %v320, 82
    %v322 = vpop.permute.xlu0 %321
    %vm323 = vcmask 695952
    %s324 = scalar_lea.vmem [#allocation0], 8
    %325 = vst.msk [vmem:[%s324] sm:$0x1] %vm323, %v322
    %s326 = scalar_lea.vmem %s0, 27
    %v327 = vld [vmem:[%s326] sm:$0x1]
    %328 = vrot.lane.b32.xlu0 %v327, 81
    %v329 = vpop.permute.xlu0 %328
    %vm330 = vcmask 687752
    %331 = vst.msk [vmem:[#allocation0] sm:$0x1] %vm330, %v329
    %s332 = scalar_lea.vmem %s0, 112
    %v333 = vld [vmem:[%s332] sm:$0x1]
    %334 = vrot.lane.b32.xlu0 %v333, 80
    %v335 = vpop.permute.xlu0 %334
    %vm336 = vcmask 679552
    %s337 = scalar_lea.vmem [#allocation0], 16
    %338 = vst.msk [vmem:[%s337] sm:$0x1] %vm336, %v335
    %s339 = scalar_lea.vmem %s0, 69
    %v340 = vld [vmem:[%s339] sm:$0x1]
    %341 = vrot.lane.b32.xlu0 %v340, 79
    %v342 = vpop.permute.xlu0 %341
    %vm343 = vcmask 671352
    %s344 = scalar_lea.vmem [#allocation0], 8
    %345 = vst.msk [vmem:[%s344] sm:$0x1] %vm343, %v342
    %s346 = scalar_lea.vmem %s0, 26
    %v347 = vld [vmem:[%s346] sm:$0x1]
    %348 = vrot.lane.b32.xlu0 %v347, 78
    %v349 = vpop.permute.xlu0 %348
    %vm350 = vcmask 663152
    %351 = vst.msk [vmem:[#allocation0] sm:$0x1] %vm350, %v349
    %s352 = scalar_lea.vmem %s0, 111
    %v353 = vld [vmem:[%s352] sm:$0x1]
    %354 = vrot.lane.b32.xlu0 %v353, 77
    %v355 = vpop.permute.xlu0 %354
    %vm356 = vcmask 654952
    %s357 = scalar_lea.vmem [#allocation0], 16
    %358 = vst.msk [vmem:[%s357] sm:$0x1] %vm356, %v355
    %s359 = scalar_lea.vmem %s0, 68
    %v360 = vld [vmem:[%s359] sm:$0x1]
    %361 = vrot.lane.b32.xlu0 %v360, 76
    %v362 = vpop.permute.xlu0 %361
    %vm363 = vcmask 646752
    %s364 = scalar_lea.vmem [#allocation0], 8
    %365 = vst.msk [vmem:[%s364] sm:$0x1] %vm363, %v362
    %s366 = scalar_lea.vmem %s0, 25
    %v367 = vld [vmem:[%s366] sm:$0x1]
    %368 = vrot.lane.b32.xlu0 %v367, 75
    %v369 = vpop.permute.xlu0 %368
    %vm370 = vcmask 638552
    %371 = vst.msk [vmem:[#allocation0] sm:$0x1] %vm370, %v369
    %s372 = scalar_lea.vmem %s0, 110
    %v373 = vld [vmem:[%s372] sm:$0x1]
    %374 = vrot.lane.b32.xlu0 %v373, 74
    %v375 = vpop.permute.xlu0 %374
    %vm376 = vcmask 630352
    %s377 = scalar_lea.vmem [#allocation0], 16
    %378 = vst.msk [vmem:[%s377] sm:$0x1] %vm376, %v375
    %s379 = scalar_lea.vmem %s0, 67
    %v380 = vld [vmem:[%s379] sm:$0x1]
    %381 = vrot.lane.b32.xlu0 %v380, 73
    %v382 = vpop.permute.xlu0 %381
    %vm383 = vcmask 622152
    %s384 = scalar_lea.vmem [#allocation0], 8
    %385 = vst.msk [vmem:[%s384] sm:$0x1] %vm383, %v382
    %s386 = scalar_lea.vmem %s0, 24
    %v387 = vld [vmem:[%s386] sm:$0x1]
    %388 = vrot.lane.b32.xlu0 %v387, 72
    %v389 = vpop.permute.xlu0 %388
    %vm390 = vcmask 613952
    %391 = vst.msk [vmem:[#allocation0] sm:$0x1] %vm390, %v389
    %s392 = scalar_lea.vmem %s0, 109
    %v393 = vld [vmem:[%s392] sm:$0x1]
    %394 = vrot.lane.b32.xlu0 %v393, 71
    %v395 = vpop.permute.xlu0 %394
    %vm396 = vcmask 605752
    %s397 = scalar_lea.vmem [#allocation0], 16
    %398 = vst.msk [vmem:[%s397] sm:$0x1] %vm396, %v395
    %s399 = scalar_lea.vmem %s0, 66
    %v400 = vld [vmem:[%s399] sm:$0x1]
    %401 = vrot.lane.b32.xlu0 %v400, 70
    %v402 = vpop.permute.xlu0 %401
    %vm403 = vcmask 597552
    %s404 = scalar_lea.vmem [#allocation0], 8
    %405 = vst.msk [vmem:[%s404] sm:$0x1] %vm403, %v402
    %s406 = scalar_lea.vmem %s0, 23
    %v407 = vld [vmem:[%s406] sm:$0x1]
    %408 = vrot.lane.b32.xlu0 %v407, 69
    %v409 = vpop.permute.xlu0 %408
    %vm410 = vcmask 589352
    %411 = vst.msk [vmem:[#allocation0] sm:$0x1] %vm410, %v409
    %s412 = scalar_lea.vmem %s0, 108
    %v413 = vld [vmem:[%s412] sm:$0x1]
    %414 = vrot.lane.b32.xlu0 %v413, 68
    %v415 = vpop.permute.xlu0 %414
    %vm416 = vcmask 581152
    %s417 = scalar_lea.vmem [#allocation0], 16
    %418 = vst.msk [vmem:[%s417] sm:$0x1] %vm416, %v415
    %s419 = scalar_lea.vmem %s0, 65
    %v420 = vld [vmem:[%s419] sm:$0x1]
    %421 = vrot.lane.b32.xlu0 %v420, 67
    %v422 = vpop.permute.xlu0 %421
    %vm423 = vcmask 572952
    %s424 = scalar_lea.vmem [#allocation0], 8
    %425 = vst.msk [vmem:[%s424] sm:$0x1] %vm423, %v422
    %s426 = scalar_lea.vmem %s0, 22
    %v427 = vld [vmem:[%s426] sm:$0x1]
    %428 = vrot.lane.b32.xlu0 %v427, 66
    %v429 = vpop.permute.xlu0 %428
    %vm430 = vcmask 564752
    %431 = vst.msk [vmem:[#allocation0] sm:$0x1] %vm430, %v429
    %s432 = scalar_lea.vmem %s0, 107
    %v433 = vld [vmem:[%s432] sm:$0x1]
    %434 = vrot.lane.b32.xlu0 %v433, 65
    %v435 = vpop.permute.xlu0 %434
    %vm436 = vcmask 556552
    %s437 = scalar_lea.vmem [#allocation0], 16
    %438 = vst.msk [vmem:[%s437] sm:$0x1] %vm436, %v435
    %s439 = scalar_lea.vmem %s0, 64
    %v440 = vld [vmem:[%s439] sm:$0x1]
    %441 = vrot.lane.b32.xlu0 %v440, 64
    %v442 = vpop.permute.xlu0 %441
    %vm443 = vcmask 548352
    %s444 = scalar_lea.vmem [#allocation0], 8
    %445 = vst.msk [vmem:[%s444] sm:$0x1] %vm443, %v442
    %s446 = scalar_lea.vmem %s0, 21
    %v447 = vld [vmem:[%s446] sm:$0x1]
    %448 = vrot.lane.b32.xlu0 %v447, 63
    %v449 = vpop.permute.xlu0 %448
    %vm450 = vcmask 540152
    %451 = vst.msk [vmem:[#allocation0] sm:$0x1] %vm450, %v449
    %s452 = scalar_lea.vmem %s0, 106
    %v453 = vld [vmem:[%s452] sm:$0x1]
    %454 = vrot.lane.b32.xlu0 %v453, 62
    %v455 = vpop.permute.xlu0 %454
    %vm456 = vcmask 531952
    %s457 = scalar_lea.vmem [#allocation0], 16
    %458 = vst.msk [vmem:[%s457] sm:$0x1] %vm456, %v455
    %s459 = scalar_lea.vmem %s0, 63
    %v460 = vld [vmem:[%s459] sm:$0x1]
    %461 = vrot.lane.b32.xlu0 %v460, 61
    %v462 = vpop.permute.xlu0 %461
    %vm463 = vcmask 523752
    %s464 = scalar_lea.vmem [#allocation0], 8
    %465 = vst.msk [vmem:[%s464] sm:$0x1] %vm463, %v462
    %s466 = scalar_lea.vmem %s0, 20
    %v467 = vld [vmem:[%s466] sm:$0x1]
    %468 = vrot.lane.b32.xlu0 %v467, 60
    %v469 = vpop.permute.xlu0 %468
    %vm470 = vcmask 515552
    %471 = vst.msk [vmem:[#allocation0] sm:$0x1] %vm470, %v469
    %s472 = scalar_lea.vmem %s0, 105
    %v473 = vld [vmem:[%s472] sm:$0x1]
    %474 = vrot.lane.b32.xlu0 %v473, 59
    %v475 = vpop.permute.xlu0 %474
    %vm476 = vcmask 507352
    %s477 = scalar_lea.vmem [#allocation0], 16
    %478 = vst.msk [vmem:[%s477] sm:$0x1] %vm476, %v475
    %s479 = scalar_lea.vmem %s0, 62
    %v480 = vld [vmem:[%s479] sm:$0x1]
    %481 = vrot.lane.b32.xlu0 %v480, 58
    %v482 = vpop.permute.xlu0 %481
    %vm483 = vcmask 499152
    %s484 = scalar_lea.vmem [#allocation0], 8
    %485 = vst.msk [vmem:[%s484] sm:$0x1] %vm483, %v482
    %s486 = scalar_lea.vmem %s0, 19
    %v487 = vld [vmem:[%s486] sm:$0x1]
    %488 = vrot.lane.b32.xlu0 %v487, 57
    %v489 = vpop.permute.xlu0 %488
    %vm490 = vcmask 490952
    %491 = vst.msk [vmem:[#allocation0] sm:$0x1] %vm490, %v489
    %s492 = scalar_lea.vmem %s0, 104
    %v493 = vld [vmem:[%s492] sm:$0x1]
    %494 = vrot.lane.b32.xlu0 %v493, 56
    %v495 = vpop.permute.xlu0 %494
    %vm496 = vcmask 482752
    %s497 = scalar_lea.vmem [#allocation0], 16
    %498 = vst.msk [vmem:[%s497] sm:$0x1] %vm496, %v495
    %s499 = scalar_lea.vmem %s0, 61
    %v500 = vld [vmem:[%s499] sm:$0x1]
    %501 = vrot.lane.b32.xlu0 %v500, 55
    %v502 = vpop.permute.xlu0 %501
    %vm503 = vcmask 474552
    %s504 = scalar_lea.vmem [#allocation0], 8
    %505 = vst.msk [vmem:[%s504] sm:$0x1] %vm503, %v502
    %s506 = scalar_lea.vmem %s0, 18
    %v507 = vld [vmem:[%s506] sm:$0x1]
    %508 = vrot.lane.b32.xlu0 %v507, 54
    %v509 = vpop.permute.xlu0 %508
    %vm510 = vcmask 466352
    %511 = vst.msk [vmem:[#allocation0] sm:$0x1] %vm510, %v509
    %s512 = scalar_lea.vmem %s0, 103
    %v513 = vld [vmem:[%s512] sm:$0x1]
    %514 = vrot.lane.b32.xlu0 %v513, 53
    %v515 = vpop.permute.xlu0 %514
    %vm516 = vcmask 458152
    %s517 = scalar_lea.vmem [#allocation0], 16
    %518 = vst.msk [vmem:[%s517] sm:$0x1] %vm516, %v515
    %s519 = scalar_lea.vmem %s0, 60
    %v520 = vld [vmem:[%s519] sm:$0x1]
    %521 = vrot.lane.b32.xlu0 %v520, 52
    %v522 = vpop.permute.xlu0 %521
    %vm523 = vcmask 449952
    %s524 = scalar_lea.vmem [#allocation0], 8
    %525 = vst.msk [vmem:[%s524] sm:$0x1] %vm523, %v522
    %s526 = scalar_lea.vmem %s0, 17
    %v527 = vld [vmem:[%s526] sm:$0x1]
    %528 = vrot.lane.b32.xlu0 %v527, 51
    %v529 = vpop.permute.xlu0 %528
    %vm530 = vcmask 441752
    %531 = vst.msk [vmem:[#allocation0] sm:$0x1] %vm530, %v529
    %s532 = scalar_lea.vmem %s0, 102
    %v533 = vld [vmem:[%s532] sm:$0x1]
    %534 = vrot.lane.b32.xlu0 %v533, 50
    %v535 = vpop.permute.xlu0 %534
    %vm536 = vcmask 433552
    %s537 = scalar_lea.vmem [#allocation0], 16
    %538 = vst.msk [vmem:[%s537] sm:$0x1] %vm536, %v535
    %s539 = scalar_lea.vmem %s0, 59
    %v540 = vld [vmem:[%s539] sm:$0x1]
    %541 = vrot.lane.b32.xlu0 %v540, 49
    %v542 = vpop.permute.xlu0 %541
    %vm543 = vcmask 425352
    %s544 = scalar_lea.vmem [#allocation0], 8
    %545 = vst.msk [vmem:[%s544] sm:$0x1] %vm543, %v542
    %s546 = scalar_lea.vmem %s0, 16
    %v547 = vld [vmem:[%s546] sm:$0x1]
    %548 = vrot.lane.b32.xlu0 %v547, 48
    %v549 = vpop.permute.xlu0 %548
    %vm550 = vcmask 417152
    %551 = vst.msk [vmem:[#allocation0] sm:$0x1] %vm550, %v549
    %s552 = scalar_lea.vmem %s0, 101
    %v553 = vld [vmem:[%s552] sm:$0x1]
    %554 = vrot.lane.b32.xlu0 %v553, 47
    %v555 = vpop.permute.xlu0 %554
    %vm556 = vcmask 408952
    %s557 = scalar_lea.vmem [#allocation0], 16
    %558 = vst.msk [vmem:[%s557] sm:$0x1] %vm556, %v555
    %s559 = scalar_lea.vmem %s0, 58
    %v560 = vld [vmem:[%s559] sm:$0x1]
    %561 = vrot.lane.b32.xlu0 %v560, 46
    %v562 = vpop.permute.xlu0 %561
    %vm563 = vcmask 400752
    %s564 = scalar_lea.vmem [#allocation0], 8
    %565 = vst.msk [vmem:[%s564] sm:$0x1] %vm563, %v562
    %s566 = scalar_lea.vmem %s0, 15
    %v567 = vld [vmem:[%s566] sm:$0x1]
    %568 = vrot.lane.b32.xlu0 %v567, 45
    %v569 = vpop.permute.xlu0 %568
    %vm570 = vcmask 392552
    %571 = vst.msk [vmem:[#allocation0] sm:$0x1] %vm570, %v569
    %s572 = scalar_lea.vmem %s0, 100
    %v573 = vld [vmem:[%s572] sm:$0x1]
    %574 = vrot.lane.b32.xlu0 %v573, 44
    %v575 = vpop.permute.xlu0 %574
    %vm576 = vcmask 384352
    %s577 = scalar_lea.vmem [#allocation0], 16
    %578 = vst.msk [vmem:[%s577] sm:$0x1] %vm576, %v575
    %s579 = scalar_lea.vmem %s0, 57
    %v580 = vld [vmem:[%s579] sm:$0x1]
    %581 = vrot.lane.b32.xlu0 %v580, 43
    %v582 = vpop.permute.xlu0 %581
    %vm583 = vcmask 376152
    %s584 = scalar_lea.vmem [#allocation0], 8
    %585 = vst.msk [vmem:[%s584] sm:$0x1] %vm583, %v582
    %s586 = scalar_lea.vmem %s0, 14
    %v587 = vld [vmem:[%s586] sm:$0x1]
    %588 = vrot.lane.b32.xlu0 %v587, 42
    %v589 = vpop.permute.xlu0 %588
    %vm590 = vcmask 367952
    %591 = vst.msk [vmem:[#allocation0] sm:$0x1] %vm590, %v589
    %s592 = scalar_lea.vmem %s0, 99
    %v593 = vld [vmem:[%s592] sm:$0x1]
    %594 = vrot.lane.b32.xlu0 %v593, 41
    %v595 = vpop.permute.xlu0 %594
    %vm596 = vcmask 359752
    %s597 = scalar_lea.vmem [#allocation0], 16
    %598 = vst.msk [vmem:[%s597] sm:$0x1] %vm596, %v595
    %s599 = scalar_lea.vmem %s0, 56
    %v600 = vld [vmem:[%s599] sm:$0x1]
    %601 = vrot.lane.b32.xlu0 %v600, 40
    %v602 = vpop.permute.xlu0 %601
    %vm603 = vcmask 351552
    %s604 = scalar_lea.vmem [#allocation0], 8
    %605 = vst.msk [vmem:[%s604] sm:$0x1] %vm603, %v602
    %s606 = scalar_lea.vmem %s0, 13
    %v607 = vld [vmem:[%s606] sm:$0x1]
    %608 = vrot.lane.b32.xlu0 %v607, 39
    %v609 = vpop.permute.xlu0 %608
    %vm610 = vcmask 343352
    %611 = vst.msk [vmem:[#allocation0] sm:$0x1] %vm610, %v609
    %s612 = scalar_lea.vmem %s0, 98
    %v613 = vld [vmem:[%s612] sm:$0x1]
    %614 = vrot.lane.b32.xlu0 %v613, 38
    %v615 = vpop.permute.xlu0 %614
    %vm616 = vcmask 335152
    %s617 = scalar_lea.vmem [#allocation0], 16
    %618 = vst.msk [vmem:[%s617] sm:$0x1] %vm616, %v615
    %s619 = scalar_lea.vmem %s0, 55
    %v620 = vld [vmem:[%s619] sm:$0x1]
    %621 = vrot.lane.b32.xlu0 %v620, 37
    %v622 = vpop.permute.xlu0 %621
    %vm623 = vcmask 326952
    %s624 = scalar_lea.vmem [#allocation0], 8
    %625 = vst.msk [vmem:[%s624] sm:$0x1] %vm623, %v622
    %s626 = scalar_lea.vmem %s0, 12
    %v627 = vld [vmem:[%s626] sm:$0x1]
    %628 = vrot.lane.b32.xlu0 %v627, 36
    %v629 = vpop.permute.xlu0 %628
    %vm630 = vcmask 318752
    %631 = vst.msk [vmem:[#allocation0] sm:$0x1] %vm630, %v629
    %s632 = scalar_lea.vmem %s0, 97
    %v633 = vld [vmem:[%s632] sm:$0x1]
    %634 = vrot.lane.b32.xlu0 %v633, 35
    %v635 = vpop.permute.xlu0 %634
    %vm636 = vcmask 310552
    %s637 = scalar_lea.vmem [#allocation0], 16
    %638 = vst.msk [vmem:[%s637] sm:$0x1] %vm636, %v635
    %s639 = scalar_lea.vmem %s0, 54
    %v640 = vld [vmem:[%s639] sm:$0x1]
    %641 = vrot.lane.b32.xlu0 %v640, 34
    %v642 = vpop.permute.xlu0 %641
    %vm643 = vcmask 302352
    %s644 = scalar_lea.vmem [#allocation0], 8
    %645 = vst.msk [vmem:[%s644] sm:$0x1] %vm643, %v642
    %s646 = scalar_lea.vmem %s0, 11
    %v647 = vld [vmem:[%s646] sm:$0x1]
    %648 = vrot.lane.b32.xlu0 %v647, 33
    %v649 = vpop.permute.xlu0 %648
    %vm650 = vcmask 294152
    %651 = vst.msk [vmem:[#allocation0] sm:$0x1] %vm650, %v649
    %s652 = scalar_lea.vmem %s0, 96
    %v653 = vld [vmem:[%s652] sm:$0x1]
    %654 = vrot.lane.b32.xlu0 %v653, 32
    %v655 = vpop.permute.xlu0 %654
    %vm656 = vcmask 285952
    %s657 = scalar_lea.vmem [#allocation0], 16
    %658 = vst.msk [vmem:[%s657] sm:$0x1] %vm656, %v655
    %s659 = scalar_lea.vmem %s0, 53
    %v660 = vld [vmem:[%s659] sm:$0x1]
    %661 = vrot.lane.b32.xlu0 %v660, 31
    %v662 = vpop.permute.xlu0 %661
    %vm663 = vcmask 277752
    %s664 = scalar_lea.vmem [#allocation0], 8
    %665 = vst.msk [vmem:[%s664] sm:$0x1] %vm663, %v662
    %s666 = scalar_lea.vmem %s0, 10
    %v667 = vld [vmem:[%s666] sm:$0x1]
    %668 = vrot.lane.b32.xlu0 %v667, 30
    %v669 = vpop.permute.xlu0 %668
    %vm670 = vcmask 269552
    %671 = vst.msk [vmem:[#allocation0] sm:$0x1] %vm670, %v669
    %s672 = scalar_lea.vmem %s0, 95
    %v673 = vld [vmem:[%s672] sm:$0x1]
    %674 = vrot.lane.b32.xlu0 %v673, 29
    %v675 = vpop.permute.xlu0 %674
    %vm676 = vcmask 261352
    %s677 = scalar_lea.vmem [#allocation0], 16
    %678 = vst.msk [vmem:[%s677] sm:$0x1] %vm676, %v675
    %s679 = scalar_lea.vmem %s0, 52
    %v680 = vld [vmem:[%s679] sm:$0x1]
    %681 = vrot.lane.b32.xlu0 %v680, 28
    %v682 = vpop.permute.xlu0 %681
    %vm683 = vcmask 253152
    %s684 = scalar_lea.vmem [#allocation0], 8
    %685 = vst.msk [vmem:[%s684] sm:$0x1] %vm683, %v682
    %s686 = scalar_lea.vmem %s0, 9
    %v687 = vld [vmem:[%s686] sm:$0x1]
    %688 = vrot.lane.b32.xlu0 %v687, 27
    %v689 = vpop.permute.xlu0 %688
    %vm690 = vcmask 244952
    %691 = vst.msk [vmem:[#allocation0] sm:$0x1] %vm690, %v689
    %s692 = scalar_lea.vmem %s0, 94
    %v693 = vld [vmem:[%s692] sm:$0x1]
    %694 = vrot.lane.b32.xlu0 %v693, 26
    %v695 = vpop.permute.xlu0 %694
    %vm696 = vcmask 236752
    %s697 = scalar_lea.vmem [#allocation0], 16
    %698 = vst.msk [vmem:[%s697] sm:$0x1] %vm696, %v695
    %s699 = scalar_lea.vmem %s0, 51
    %v700 = vld [vmem:[%s699] sm:$0x1]
    %701 = vrot.lane.b32.xlu0 %v700, 25
    %v702 = vpop.permute.xlu0 %701
    %vm703 = vcmask 228552
    %s704 = scalar_lea.vmem [#allocation0], 8
    %705 = vst.msk [vmem:[%s704] sm:$0x1] %vm703, %v702
    %s706 = scalar_lea.vmem %s0, 8
    %v707 = vld [vmem:[%s706] sm:$0x1]
    %708 = vrot.lane.b32.xlu0 %v707, 24
    %v709 = vpop.permute.xlu0 %708
    %vm710 = vcmask 220352
    %711 = vst.msk [vmem:[#allocation0] sm:$0x1] %vm710, %v709
    %s712 = scalar_lea.vmem %s0, 93
    %v713 = vld [vmem:[%s712] sm:$0x1]
    %714 = vrot.lane.b32.xlu0 %v713, 23
    %v715 = vpop.permute.xlu0 %714
    %vm716 = vcmask 212152
    %s717 = scalar_lea.vmem [#allocation0], 16
    %718 = vst.msk [vmem:[%s717] sm:$0x1] %vm716, %v715
    %s719 = scalar_lea.vmem %s0, 50
    %v720 = vld [vmem:[%s719] sm:$0x1]
    %721 = vrot.lane.b32.xlu0 %v720, 22
    %v722 = vpop.permute.xlu0 %721
    %vm723 = vcmask 203952
    %s724 = scalar_lea.vmem [#allocation0], 8
    %725 = vst.msk [vmem:[%s724] sm:$0x1] %vm723, %v722
    %s726 = scalar_lea.vmem %s0, 7
    %v727 = vld [vmem:[%s726] sm:$0x1]
    %728 = vrot.lane.b32.xlu0 %v727, 21
    %v729 = vpop.permute.xlu0 %728
    %vm730 = vcmask 195752
    %731 = vst.msk [vmem:[#allocation0] sm:$0x1] %vm730, %v729
    %s732 = scalar_lea.vmem %s0, 92
    %v733 = vld [vmem:[%s732] sm:$0x1]
    %734 = vrot.lane.b32.xlu0 %v733, 20
    %v735 = vpop.permute.xlu0 %734
    %vm736 = vcmask 187552
    %s737 = scalar_lea.vmem [#allocation0], 16
    %738 = vst.msk [vmem:[%s737] sm:$0x1] %vm736, %v735
    %s739 = scalar_lea.vmem %s0, 49
    %v740 = vld [vmem:[%s739] sm:$0x1]
    %741 = vrot.lane.b32.xlu0 %v740, 19
    %v742 = vpop.permute.xlu0 %741
    %vm743 = vcmask 179352
    %s744 = scalar_lea.vmem [#allocation0], 8
    %745 = vst.msk [vmem:[%s744] sm:$0x1] %vm743, %v742
    %s746 = scalar_lea.vmem %s0, 6
    %v747 = vld [vmem:[%s746] sm:$0x1]
    %748 = vrot.lane.b32.xlu0 %v747, 18
    %v749 = vpop.permute.xlu0 %748
    %vm750 = vcmask 171152
    %751 = vst.msk [vmem:[#allocation0] sm:$0x1] %vm750, %v749
    %s752 = scalar_lea.vmem %s0, 91
    %v753 = vld [vmem:[%s752] sm:$0x1]
    %754 = vrot.lane.b32.xlu0 %v753, 17
    %v755 = vpop.permute.xlu0 %754
    %vm756 = vcmask 162952
    %s757 = scalar_lea.vmem [#allocation0], 16
    %758 = vst.msk [vmem:[%s757] sm:$0x1] %vm756, %v755
    %s759 = scalar_lea.vmem %s0, 48
    %v760 = vld [vmem:[%s759] sm:$0x1]
    %761 = vrot.lane.b32.xlu0 %v760, 16
    %v762 = vpop.permute.xlu0 %761
    %vm763 = vcmask 154752
    %s764 = scalar_lea.vmem [#allocation0], 8
    %765 = vst.msk [vmem:[%s764] sm:$0x1] %vm763, %v762
    %s766 = scalar_lea.vmem %s0, 5
    %v767 = vld [vmem:[%s766] sm:$0x1]
    %768 = vrot.lane.b32.xlu0 %v767, 15
    %v769 = vpop.permute.xlu0 %768
    %vm770 = vcmask 146552
    %771 = vst.msk [vmem:[#allocation0] sm:$0x1] %vm770, %v769
    %s772 = scalar_lea.vmem %s0, 90
    %v773 = vld [vmem:[%s772] sm:$0x1]
    %774 = vrot.lane.b32.xlu0 %v773, 14
    %v775 = vpop.permute.xlu0 %774
    %vm776 = vcmask 138352
    %s777 = scalar_lea.vmem [#allocation0], 16
    %778 = vst.msk [vmem:[%s777] sm:$0x1] %vm776, %v775
    %s779 = scalar_lea.vmem %s0, 47
    %v780 = vld [vmem:[%s779] sm:$0x1]
    %781 = vrot.lane.b32.xlu0 %v780, 13
    %v782 = vpop.permute.xlu0 %781
    %vm783 = vcmask 130152
    %s784 = scalar_lea.vmem [#allocation0], 8
    %785 = vst.msk [vmem:[%s784] sm:$0x1] %vm783, %v782
    %s786 = scalar_lea.vmem %s0, 4
    %v787 = vld [vmem:[%s786] sm:$0x1]
    %788 = vrot.lane.b32.xlu0 %v787, 12
    %v789 = vpop.permute.xlu0 %788
    %vm790 = vcmask 121952
    %791 = vst.msk [vmem:[#allocation0] sm:$0x1] %vm790, %v789
    %s792 = scalar_lea.vmem %s0, 89
    %v793 = vld [vmem:[%s792] sm:$0x1]
    %794 = vrot.lane.b32.xlu0 %v793, 11
    %v795 = vpop.permute.xlu0 %794
    %vm796 = vcmask 113752
    %s797 = scalar_lea.vmem [#allocation0], 16
    %798 = vst.msk [vmem:[%s797] sm:$0x1] %vm796, %v795
    %s799 = scalar_lea.vmem %s0, 46
    %v800 = vld [vmem:[%s799] sm:$0x1]
    %801 = vrot.lane.b32.xlu0 %v800, 10
    %v802 = vpop.permute.xlu0 %801
    %vm803 = vcmask 105552
    %s804 = scalar_lea.vmem [#allocation0], 8
    %805 = vst.msk [vmem:[%s804] sm:$0x1] %vm803, %v802
    %s806 = scalar_lea.vmem %s0, 3
    %v807 = vld [vmem:[%s806] sm:$0x1]
    %808 = vrot.lane.b32.xlu0 %v807, 9
    %v809 = vpop.permute.xlu0 %808
    %vm810 = vcmask 97352
    %811 = vst.msk [vmem:[#allocation0] sm:$0x1] %vm810, %v809
    %s812 = scalar_lea.vmem %s0, 88
    %v813 = vld [vmem:[%s812] sm:$0x1]
    %814 = vrot.lane.b32.xlu0 %v813, 8
    %v815 = vpop.permute.xlu0 %814
    %vm816 = vcmask 89152
    %s817 = scalar_lea.vmem [#allocation0], 16
    %818 = vst.msk [vmem:[%s817] sm:$0x1] %vm816, %v815
    %s819 = scalar_lea.vmem %s0, 45
    %v820 = vld [vmem:[%s819] sm:$0x1]
    %821 = vrot.lane.b32.xlu0 %v820, 7
    %v822 = vpop.permute.xlu0 %821
    %vm823 = vcmask 80952
    %s824 = scalar_lea.vmem [#allocation0], 8
    %825 = vst.msk [vmem:[%s824] sm:$0x1] %vm823, %v822
    %s826 = scalar_lea.vmem %s0, 2
    %v827 = vld [vmem:[%s826] sm:$0x1]
    %828 = vrot.lane.b32.xlu0 %v827, 6
    %v829 = vpop.permute.xlu0 %828
    %vm830 = vcmask 72752
    %831 = vst.msk [vmem:[#allocation0] sm:$0x1] %vm830, %v829
    %s832 = scalar_lea.vmem %s0, 87
    %v833 = vld [vmem:[%s832] sm:$0x1]
    %834 = vrot.lane.b32.xlu0 %v833, 5
    %v835 = vpop.permute.xlu0 %834
    %vm836 = vcmask 64552
    %s837 = scalar_lea.vmem [#allocation0], 16
    %838 = vst.msk [vmem:[%s837] sm:$0x1] %vm836, %v835
    %s839 = scalar_lea.vmem %s0, 44
    %v840 = vld [vmem:[%s839] sm:$0x1]
    %841 = vrot.lane.b32.xlu0 %v840, 4
    %v842 = vpop.permute.xlu0 %841
    %vm843 = vcmask 56352
    %s844 = scalar_lea.vmem [#allocation0], 8
    %845 = vst.msk [vmem:[%s844] sm:$0x1] %vm843, %v842
    %s846 = scalar_lea.vmem %s0, 1
    %v847 = vld [vmem:[%s846] sm:$0x1]
    %848 = vrot.lane.b32.xlu0 %v847, 3
    %v849 = vpop.permute.xlu0 %848
    %vm850 = vcmask 48152
    %851 = vst.msk [vmem:[#allocation0] sm:$0x1] %vm850, %v849
    %s852 = scalar_lea.vmem %s0, 86
    %v853 = vld [vmem:[%s852] sm:$0x1]
    %854 = vrot.lane.b32.xlu0 %v853, 2
    %v855 = vpop.permute.xlu0 %854
    %vm856 = vcmask 39952
    %s857 = scalar_lea.vmem [#allocation0], 16
    %858 = vst.msk [vmem:[%s857] sm:$0x1] %vm856, %v855
    %s859 = scalar_lea.vmem %s0, 43
    %v860 = vld [vmem:[%s859] sm:$0x1]
    %861 = vrot.lane.b32.xlu0 %v860, 1
    %v862 = vpop.permute.xlu0 %861
    %vm863 = vcmask 31752
    %s864 = scalar_lea.vmem [#allocation0], 8
    %865 = vst.msk [vmem:[%s864] sm:$0x1] %vm863, %v862
    %s867 = sshllo.u32 0, 1
    %v869 = vld [vmem:[#allocation0] sm:%s867]
    %s870 = sshllo.u32 0, 1
    %871 = vst [vmem:[%s1] sm:%s870] %v869
    %s872 = scalar_lea.vmem [#allocation0], 8
    %v873 = vld [vmem:[%s872] sm:%s867]
    %s874 = sshllo.u32 0, 1
    %s875 = scalar_lea.vmem %s1, 1
    %876 = vst [vmem:[%s875] sm:%s874] %v873
    %s877 = scalar_lea.vmem [#allocation0], 16
    %v878 = vld [vmem:[%s877] sm:%s867]
    %s879 = sshllo.u32 0, 1
    %s880 = smul.addr 1, 2
    %s881 = scalar_lea.vmem %s1, %s880
    %882 = vst [vmem:[%s881] sm:%s879] %v878

// kernel: full_net_forward.1
$region0: #{full_net_forward.1}
  #allocation0 [shape = 'u32[]', space=smem, size = 0x4, offset = 0x4, fixed_abs, tag = 'smem constant byte address 0x4 - core index']
  #allocation1 [shape = 'u32[144,128]{1,0:T(1,128)}', space=vmem, size = 0x12000, scoped, tag = 'internal scratch']
  %s0 = inlined_call_operand.vmem [shape: f32[1,1,384], index: 0, kind: input, shape index: {}]
  %s1 = inlined_call_operand.vmem [shape: f32[1,1,384], index: 1, kind: input, shape index: {}]
  %s2 = inlined_call_operand.vmem [shape: f32[2,64,384], index: 2, kind: input, shape index: {}]
  %s3 = inlined_call_operand.vmem [shape: f32[2,64,384], index: 3, kind: output, shape index: {}]
  %s4 = sld [smem:[#allocation0]]
  $region45: #{full_net_forward.1} parent=0
    _
  %s6 = ssub.s32 1, %s4
  %s7 = scalar_select 0, %s6, %s4
  loop: start=0, step=1, limit=4
  $region2: #{full_net_forward.1} parent=0 // loop_pre_header
    _
  $region3: #{full_net_forward.1} parent=0 // loop_header
    %s9 = sphi 0, %s13
    %p10 = scmp.ge.s32.totalorder %s9, 4
    %s16 = sphi 0, %s28
    %s17 = sphi 0, %s24
    %s18 = sphi 0, %s16
    %s19 = sphi 0, %s17
    %s20 = sphi 0, %s18
    %s21 = sphi 0, %s19
    %s29 = sphi 0, %s29
    %s31 = sphi 0, %s29
    %s32 = sphi 0, %s31
    %s46 = sphi 0, %s32
    %s50 = sphi 0, %s50
    %s52 = sphi 0, %s50
    %s53 = sphi 0, %s52
    %s67 = sphi 0, %s53
    %s75 = sphi 0, %s77
    %s78 = sphi 0, %s75
    %s79 = sphi 0, %s78
    %s95 = sphi 0, %s79
    %s103 = sphi 0, %s105
    %s106 = sphi 0, %s103
    %s107 = sphi 0, %s106
    %s123 = sphi 0, %s107
  $region4: #{full_net_forward.1} parent=0 // loop_header_branch
    %12 = sbr.rel (%p10) target = $region8
  $region5: #{full_net_forward.1} parent=0 // loop_body
    %s14 = ssub.s32 %s9, 1
    %s15 = ssub.s32 %s9, 2
    %s22 = sadd.s32 1, %s17
    %p23 = scmp.ge.s32.totalorder %s22, 1
    %s24 = scalar_select %p23, 0, %s22
    %s25 = sadd.s32 1, %s16
    %s26 = scalar_select %p23, %s25, %s16
    %p27 = scmp.ge.s32.totalorder %s26, 2
    %s28 = scalar_select %p27, 0, %s26
    %s30 = sadd.s32 %s29, 1
    %p33 = scmp.eq.s32.totalorder %s9, 1
    %p34 = scmp.ne.s32.totalorder %s29, %s31
    %p35 = scmp.eq.s32.totalorder %s9, 0
    %p36 = por %p34, %p35
    %p37 = scmp.ne.s32.totalorder %s29, %s31
    %p38 = scmp.eq.s32.totalorder %s14, 1
    %p39 = por %p37, %p38
    %p40 = scmp.ne.s32.totalorder %s31, %s32
    %p41 = scmp.eq.s32.totalorder %s14, 0
    %p42 = por %p40, %p41
    %p43 = scmp.ne.s32.totalorder %s31, %s32
    %p44 = scmp.eq.s32.totalorder %s15, 1
    %p45 = por %p43, %p44
    %p47 = scmp.ne.s32.totalorder %s32, %s46
    %p48 = scmp.eq.s32.totalorder %s15, 0
    %p49 = por %p47, %p48
    %s51 = sadd.s32 %s50, 1
    %p54 = scmp.eq.s32.totalorder %s9, 1
    %p55 = scmp.ne.s32.totalorder %s50, %s52
    %p56 = scmp.eq.s32.totalorder %s9, 0
    %p57 = por %p55, %p56
    %p58 = scmp.ne.s32.totalorder %s50, %s52
    %p59 = scmp.eq.s32.totalorder %s14, 1
    %p60 = por %p58, %p59
    %p61 = scmp.ne.s32.totalorder %s52, %s53
    %p62 = scmp.eq.s32.totalorder %s14, 0
    %p63 = por %p61, %p62
    %p64 = scmp.ne.s32.totalorder %s52, %s53
    %p65 = scmp.eq.s32.totalorder %s15, 1
    %p66 = por %p64, %p65
    %p68 = scmp.ne.s32.totalorder %s53, %s67
    %p69 = scmp.eq.s32.totalorder %s15, 0
    %p70 = por %p68, %p69
    %s71 = ssub.s32 %s16, %s28
    %s72 = ssub.s32 %s17, %s24
    %s73 = sor.u32 %s71, %s72
    %p74 = scmp.eq.s32.totalorder %s73, 0
    %s76 = sadd.s32 %s75, 1
    %s77 = scalar_select %p74, %s75, %s76
    %p80 = pneg %p74
    %p81 = scmp.eq.s32.totalorder %s9, 1
    %p82 = por %p80, %p81
    %p83 = scmp.ne.s32.totalorder %s75, %s78
    %p84 = scmp.eq.s32.totalorder %s9, 0
    %p85 = por %p83, %p84
    %p86 = scmp.ne.s32.totalorder %s75, %s78
    %p87 = scmp.eq.s32.totalorder %s14, 1
    %p88 = por %p86, %p87
    %p89 = scmp.ne.s32.totalorder %s78, %s79
    %p90 = scmp.eq.s32.totalorder %s14, 0
    %p91 = por %p89, %p90
    %p92 = scmp.ne.s32.totalorder %s78, %s79
    %p93 = scmp.eq.s32.totalorder %s15, 1
    %p94 = por %p92, %p93
    %p96 = scmp.ne.s32.totalorder %s79, %s95
    %p97 = scmp.eq.s32.totalorder %s15, 0
    %p98 = por %p96, %p97
    %s99 = ssub.s32 %s16, %s28
    %s100 = ssub.s32 %s17, %s24
    %s101 = sor.u32 %s99, %s100
    %p102 = scmp.eq.s32.totalorder %s101, 0
    %s104 = sadd.s32 %s103, 1
    %s105 = scalar_select %p102, %s103, %s104
    %p108 = pneg %p102
    %p109 = scmp.eq.s32.totalorder %s9, 1
    %p110 = por %p108, %p109
    %p111 = scmp.ne.s32.totalorder %s103, %s106
    %p112 = scmp.eq.s32.totalorder %s9, 0
    %p113 = por %p111, %p112
    %p114 = scmp.ne.s32.totalorder %s103, %s106
    %p115 = scmp.eq.s32.totalorder %s14, 1
    %p116 = por %p114, %p115
    %p117 = scmp.ne.s32.totalorder %s106, %s107
    %p118 = scmp.eq.s32.totalorder %s14, 0
    %p119 = por %p117, %p118
    %p120 = scmp.ne.s32.totalorder %s106, %s107
    %p121 = scmp.eq.s32.totalorder %s15, 1
    %p122 = por %p120, %p121
    %p124 = scmp.ne.s32.totalorder %s107, %s123
    %p125 = scmp.eq.s32.totalorder %s15, 0
    %p126 = por %p124, %p125
    %p127 = scmp.le.s32.totalorder 1, %s9
    %p128 = scmp.lt.s32.totalorder %s9, 3
    %p129 = pnand %p127, %p128
    %p130 = pneg %p129
    // Predicated region
    $region9: #{full_net_forward.1} parent=5 // pred_check
      _
    $region10: #{full_net_forward.1} parent=5 // pred_check_branch
      %132 = sbr.rel (%p129) target = $region12
    $region11: #{full_net_forward.1} parent=5 // pred_region
      %s133 = ssub.s32 %s9, 1
      // Predicated region
      $region13: #{full_net_forward.1} parent=11 // pred_check
        %p134 = pneg %p42
      $region14: #{full_net_forward.1} parent=11 // pred_check_branch
        %136 = sbr.rel (%p134) target = $region16
      $region15: #{full_net_forward.1} parent=11 // pred_region
        _
      $region16: #{full_net_forward.1} parent=11 // pred_fallthru
        _
      // Predicated region
      $region17: #{full_net_forward.1} parent=11 // pred_check
        %p137 = pneg %p63
      $region18: #{full_net_forward.1} parent=11 // pred_check_branch
        %139 = sbr.rel (%p137) target = $region20
      $region19: #{full_net_forward.1} parent=11 // pred_region
        _
      $region20: #{full_net_forward.1} parent=11 // pred_fallthru
        _
    $region12: #{full_net_forward.1} parent=5 // pred_fallthru
      _
    %p140 = scmp.lt.s32.totalorder %s9, 2
    // Predicated region
    $region21: #{full_net_forward.1} parent=5 // pred_check
      %p141 = pneg %p140
    $region22: #{full_net_forward.1} parent=5 // pred_check_branch
      %143 = sbr.rel (%p141) target = $region24
    $region23: #{full_net_forward.1} parent=5 // pred_region
      // Predicated region
      $region25: #{full_net_forward.1} parent=23 // pred_check
        %p144 = pneg %p85
      $region26: #{full_net_forward.1} parent=23 // pred_check_branch
        %146 = sbr.rel (%p144) target = $region28
      $region27: #{full_net_forward.1} parent=23 // pred_region
        %s147 = smul.u32 8, %s17
        %p148 = scmp.lt.s32.totalorder %s16, 1
        %s149 = scalar_select %p148, %s16, 1
        %p150 = scmp.lt.s32.totalorder %s147, 7
        %s151 = scalar_select %p150, %s147, 7
        %s152 = smul.addr %s151, 3
        %s153 = smul.addr %s149, 24
        %s154 = sadd.s32 %s152, %s153
        %s155 = smul.addr %s154, 8
        %s156 = scalar_lea.vmem %s2, %s155
        %s157 = smul.u32 8, %s17
      $region28: #{full_net_forward.1} parent=23 // pred_fallthru
        _
    $region24: #{full_net_forward.1} parent=5 // pred_fallthru
      _
    %p158 = scmp.le.s32.totalorder 1, %s9
    %p159 = scmp.lt.s32.totalorder %s9, 3
    %p160 = pnand %p158, %p159
    %p161 = pneg %p160
    // Predicated region
    $region29: #{full_net_forward.1} parent=5 // pred_check
      _
    $region30: #{full_net_forward.1} parent=5 // pred_check_branch
      %163 = sbr.rel (%p160) target = $region32
    $region31: #{full_net_forward.1} parent=5 // pred_region
      %s164 = ssub.s32 %s9, 1
      %p165 = pneg %p42
      %p166 = pneg %p39
      %p167 = pneg %p63
      %p168 = pneg %p60
      %s169 = smul.u32 8, %s19
      %p170 = scmp.lt.s32.totalorder %s18, 1
      %s171 = scalar_select %p170, %s18, 1
      %p172 = scmp.lt.s32.totalorder %s169, 7
      %s173 = scalar_select %p172, %s169, 7
      %s174 = smul.addr %s173, 3
      %s175 = smul.addr %s171, 24
      %s176 = sadd.s32 %s174, %s175
      %s177 = smul.addr %s176, 8
      %s178 = scalar_lea.vmem %s2, %s177
      %p179 = pneg %p91
      %p180 = pneg %p88
      %p181 = pneg %p119
      %p182 = pneg %p116
      %s183 = smul.u32 8, %s19
      %p184 = scmp.lt.s32.totalorder %s18, 1
      %s185 = scalar_select %p184, %s18, 1
      %p186 = scmp.lt.s32.totalorder %s183, 7
      %s187 = scalar_select %p186, %s183, 7
      %s188 = smul.addr %s187, 3
      %s189 = smul.addr %s185, 24
      %s190 = sadd.s32 %s188, %s189
      %s191 = smul.addr %s190, 8
      %s192 = scalar_lea.vmem %s3, %s191
      %s193 = smul.u32 8, %s19
      %p194 = scmp.lt.s32.totalorder %s18, 1
      %s195 = scalar_select %p194, %s18, 1
      %p196 = scmp.lt.s32.totalorder %s193, 7
      %s197 = scalar_select %p196, %s193, 7
      %s198 = smul.addr %s197, 3
      %s199 = smul.addr %s195, 24
      %s200 = sadd.s32 %s198, %s199
      %s201 = smul.addr %s200, 8
      %s202 = scalar_lea.vmem %s2, %s201
      %s203 = smul.u32 8, %s19
      %s204 = smul.u32 8, %s19
      %p205 = scmp.lt.s32.totalorder %s18, 1
      %s206 = scalar_select %p205, %s18, 1
      %p207 = scmp.lt.s32.totalorder %s204, 7
      %s208 = scalar_select %p207, %s204, 7
      %s209 = smul.addr %s208, 3
      %s210 = smul.addr %s206, 24
      %s211 = sadd.s32 %s209, %s210
      %s212 = smul.addr %s211, 8
      %s213 = scalar_lea.vmem %s3, %s212
      %s214 = smul.u32 8, %s19
      %v215 = vld [vmem:[%s202] sm:$0xff]
      %v216 = vld [vmem:[%s202 + $0x8] sm:$0xff]
      %v217 = vld [vmem:[%s202 + $0x10] sm:$0xff]
      %v218 = vld [vmem:[%s202 + $0x18] sm:$0xff]
      %v219 = vld [vmem:[%s202 + $0x20] sm:$0xff]
      %v220 = vld [vmem:[%s202 + $0x28] sm:$0xff]
      %v221 = vld [vmem:[%s202 + $0x30] sm:$0xff]
      %v222 = vld [vmem:[%s202 + $0x38] sm:$0xff]
      %v223 = vld [vmem:[%s202 + $0x40] sm:$0xff]
      %v224 = vld [vmem:[%s202 + $0x48] sm:$0xff]
      %v225 = vld [vmem:[%s202 + $0x50] sm:$0xff]
      %v226 = vld [vmem:[%s202 + $0x58] sm:$0xff]
      %v227 = vld [vmem:[%s202 + $0x60] sm:$0xff]
      %v228 = vld [vmem:[%s202 + $0x68] sm:$0xff]
      %v229 = vld [vmem:[%s202 + $0x70] sm:$0xff]
      %v230 = vld [vmem:[%s202 + $0x78] sm:$0xff]
      %v231 = vld [vmem:[%s202 + $0x80] sm:$0xff]
      %v232 = vld [vmem:[%s202 + $0x88] sm:$0xff]
      %v233 = vld [vmem:[%s202 + $0x90] sm:$0xff]
      %v234 = vld [vmem:[%s202 + $0x98] sm:$0xff]
      %v235 = vld [vmem:[%s202 + $0xa0] sm:$0xff]
      %v236 = vld [vmem:[%s202 + $0xa8] sm:$0xff]
      %v237 = vld [vmem:[%s202 + $0xb0] sm:$0xff]
      %v238 = vld [vmem:[%s202 + $0xb8] sm:$0xff]
      %v239 = vld [vmem:[%s0] sm:$0x7]
      %v241 = vlaneseq
      %v242 = vshrl.u32 %v241, 7
      %v243 = vsub.s32 0, %v242
      %v244 = vrot.slane %v239, %v243
      %v245 = vlaneseq
      %v246 = vshrl.u32 %v245, 7
      %v247 = vsub.s32 1, %v246
      %v248 = vrot.slane %v239, %v247
      %v249 = vlaneseq
      %v250 = vshrl.u32 %v249, 7
      %v251 = vsub.s32 2, %v250
      %v252 = vrot.slane %v239, %v251
      %v256 = vmul.f32 %v215, %v244
      %v257 = vmul.f32 %v216, %v248
      %v258 = vmul.f32 %v217, %v252
      %v259 = vmul.f32 %v218, %v244
      %v260 = vmul.f32 %v219, %v248
      %v261 = vmul.f32 %v220, %v252
      %v262 = vmul.f32 %v221, %v244
      %v263 = vmul.f32 %v222, %v248
      %v264 = vmul.f32 %v223, %v252
      %v265 = vmul.f32 %v224, %v244
      %v266 = vmul.f32 %v225, %v248
      %v267 = vmul.f32 %v226, %v252
      %v268 = vmul.f32 %v227, %v244
      %v269 = vmul.f32 %v228, %v248
      %v270 = vmul.f32 %v229, %v252
      %v271 = vmul.f32 %v230, %v244
      %v272 = vmul.f32 %v231, %v248
      %v273 = vmul.f32 %v232, %v252
      %v274 = vmul.f32 %v233, %v244
      %v275 = vmul.f32 %v234, %v248
      %v276 = vmul.f32 %v235, %v252
      %v277 = vmul.f32 %v236, %v244
      %v278 = vmul.f32 %v237, %v248
      %v279 = vmul.f32 %v238, %v252
      %v280 = vld [vmem:[%s1] sm:$0x7]
      %v282 = vlaneseq
      %v283 = vshrl.u32 %v282, 7
      %v284 = vsub.s32 0, %v283
      %v285 = vrot.slane %v280, %v284
      %v286 = vlaneseq
      %v287 = vshrl.u32 %v286, 7
      %v288 = vsub.s32 1, %v287
      %v289 = vrot.slane %v280, %v288
      %v290 = vlaneseq
      %v291 = vshrl.u32 %v290, 7
      %v292 = vsub.s32 2, %v291
      %v293 = vrot.slane %v280, %v292
      %v297 = vadd.f32 %v256, %v285
      %v298 = vadd.f32 %v257, %v289
      %v299 = vadd.f32 %v258, %v293
      %v300 = vadd.f32 %v259, %v285
      %v301 = vadd.f32 %v260, %v289
      %v302 = vadd.f32 %v261, %v293
      %v303 = vadd.f32 %v262, %v285
      %v304 = vadd.f32 %v263, %v289
      %v305 = vadd.f32 %v264, %v293
      %v306 = vadd.f32 %v265, %v285
      %v307 = vadd.f32 %v266, %v289
      %v308 = vadd.f32 %v267, %v293
      %v309 = vadd.f32 %v268, %v285
      %v310 = vadd.f32 %v269, %v289
      %v311 = vadd.f32 %v270, %v293
      %v312 = vadd.f32 %v271, %v285
      %v313 = vadd.f32 %v272, %v289
      %v314 = vadd.f32 %v273, %v293
      %v315 = vadd.f32 %v274, %v285
      %v316 = vadd.f32 %v275, %v289
      %v317 = vadd.f32 %v276, %v293
      %v318 = vadd.f32 %v277, %v285
      %v319 = vadd.f32 %v278, %v289
      %v320 = vadd.f32 %v279, %v293
      %321 = vst [vmem:[%s213] sm:$0xff] %v297
      %322 = vst [vmem:[%s213 + $0x8] sm:$0xff] %v298
      %323 = vst [vmem:[%s213 + $0x10] sm:$0xff] %v299
      %324 = vst [vmem:[%s213 + $0x18] sm:$0xff] %v300
      %325 = vst [vmem:[%s213 + $0x20] sm:$0xff] %v301
      %326 = vst [vmem:[%s213 + $0x28] sm:$0xff] %v302
      %327 = vst [vmem:[%s213 + $0x30] sm:$0xff] %v303
      %328 = vst [vmem:[%s213 + $0x38] sm:$0xff] %v304
      %329 = vst [vmem:[%s213 + $0x40] sm:$0xff] %v305
      %330 = vst [vmem:[%s213 + $0x48] sm:$0xff] %v306
      %331 = vst [vmem:[%s213 + $0x50] sm:$0xff] %v307
      %332 = vst [vmem:[%s213 + $0x58] sm:$0xff] %v308
      %333 = vst [vmem:[%s213 + $0x60] sm:$0xff] %v309
      %334 = vst [vmem:[%s213 + $0x68] sm:$0xff] %v310
      %335 = vst [vmem:[%s213 + $0x70] sm:$0xff] %v311
      %336 = vst [vmem:[%s213 + $0x78] sm:$0xff] %v312
      %337 = vst [vmem:[%s213 + $0x80] sm:$0xff] %v313
      %338 = vst [vmem:[%s213 + $0x88] sm:$0xff] %v314
      %339 = vst [vmem:[%s213 + $0x90] sm:$0xff] %v315
      %340 = vst [vmem:[%s213 + $0x98] sm:$0xff] %v316
      %341 = vst [vmem:[%s213 + $0xa0] sm:$0xff] %v317
      %342 = vst [vmem:[%s213 + $0xa8] sm:$0xff] %v318
      %343 = vst [vmem:[%s213 + $0xb0] sm:$0xff] %v319
      %344 = vst [vmem:[%s213 + $0xb8] sm:$0xff] %v320
      %s345 = smul.u32 8, %s19
      %p346 = scmp.lt.s32.totalorder %s18, 1
      %s347 = scalar_select %p346, %s18, 1
      %p348 = scmp.lt.s32.totalorder %s345, 7
      %s349 = scalar_select %p348, %s345, 7
      %s350 = smul.addr %s349, 3
      %s351 = smul.addr %s347, 24
      %s352 = sadd.s32 %s350, %s351
      %s353 = smul.addr %s352, 8
      %s354 = scalar_lea.vmem %s3, %s353
      // Predicated region
      $region33: #{full_net_forward.1} parent=31 // pred_check
        %p355 = pneg %p116
      $region34: #{full_net_forward.1} parent=31 // pred_check_branch
        %357 = sbr.rel (%p355) target = $region36
      $region35: #{full_net_forward.1} parent=31 // pred_region
        %s358 = smul.u32 8, %s19
      $region36: #{full_net_forward.1} parent=31 // pred_fallthru
        _
    $region32: #{full_net_forward.1} parent=5 // pred_fallthru
      _
    %p359 = scmp.le.s32.totalorder 2, %s9
    // Predicated region
    $region37: #{full_net_forward.1} parent=5 // pred_check
      %p360 = pneg %p359
    $region38: #{full_net_forward.1} parent=5 // pred_check_branch
      %362 = sbr.rel (%p360) target = $region40
    $region39: #{full_net_forward.1} parent=5 // pred_region
      %s363 = ssub.s32 %s9, 2
      // Predicated region
      $region41: #{full_net_forward.1} parent=39 // pred_check
        %p364 = pneg %p122
      $region42: #{full_net_forward.1} parent=39 // pred_check_branch
        %366 = sbr.rel (%p364) target = $region44
      $region43: #{full_net_forward.1} parent=39 // pred_region
        %s367 = smul.u32 8, %s21
        %p368 = scmp.lt.s32.totalorder %s20, 1
        %s369 = scalar_select %p368, %s20, 1
        %p370 = scmp.lt.s32.totalorder %s367, 7
        %s371 = scalar_select %p370, %s367, 7
        %s372 = smul.addr %s371, 3
        %s373 = smul.addr %s369, 24
        %s374 = sadd.s32 %s372, %s373
        %s375 = smul.addr %s374, 8
        %s376 = scalar_lea.vmem %s3, %s375
      $region44: #{full_net_forward.1} parent=39 // pred_fallthru
        _
    $region40: #{full_net_forward.1} parent=5 // pred_fallthru
      _
  $region6: #{full_net_forward.1} parent=0 // loop_footer
    %s13 = sadd.s32 1, %s9
  $region7: #{full_net_forward.1} parent=0 // loop_footer_branch
    %8 = sbr.rel target = $region3
  $region8: #{full_net_forward.1} parent=0 // loop_exit
    _

</llo_original>
